<compile_context>
chip_gen: v5e
topology: v5e:2x2
jax: 0.10.0
libtpu: 0.0.40
codegen_flags: <defaults>
</compile_context>

<pallas_src>
import functools

import jax
import jax.numpy as jnp
from jax.experimental import pallas as pl
from jax.experimental.pallas import tpu as pltpu


def _round_up(x, m):
    return ((x + m - 1) // m) * m


def _cdiv(a, b):
    return (a + b - 1) // b


def _chip_vmem_bytes():
    """Physical VMEM per core; conservative (v7x) fallback if query fails."""
    try:
        return int(pltpu.get_tpu_info().vmem_capacity_bytes)
    except Exception:
        return 64 * 1024 * 1024


def _pick_sub_rows(C, N):
    """Rows per in-kernel sub-chunk: keep (sub, C) f32 intermediates ~<= 1 MiB,
    multiple of 16 (bf16 sublane packing), in [16, 512], no larger than N."""
    cap = (1 << 20) // max(C * 4, 1)
    sub = max(16, min(512, (cap // 16) * 16))
    sub = min(sub, _round_up(max(N, 1), 16))
    return max(16, sub)


def _dice_loss_kernel(x_ref, t_ref, out_ref, *, sub_rows, n_rows, block_n,
                      gamma, scale, ignore_index, eps, smooth):
    nsub = t_ref.shape[1]                      # static sub-chunks per block
    C = x_ref.shape[1]
    row_base = pl.program_id(0) * block_n

    out_ref[...] = jnp.zeros_like(out_ref)     # per-block partials accumulator

    @pl.loop(0, nsub)
    def _(j):
        r0 = pl.multiple_of(j * sub_rows, sub_rows)
        # x sub-chunk: stream caller dtype from VMEM block, upcast here.
        x = x_ref[pl.ds(r0, sub_rows), :].astype(jnp.float32)      # (S, C)
        # target sub-chunk: lane-dense (1, S) -> (S, 1) relayout (XLU is idle).
        t_row = t_ref[0, pl.ds(j, 1), :]                           # (1, S) i32
        t_col = jnp.transpose(t_row, (1, 0))                       # (S, 1) i32

        # Numerically stable softmax pieces; approx reciprocal on EUP.
        m = jnp.max(x, axis=-1, keepdims=True)                     # (S, 1)
        e = jnp.exp(x - m)                                         # (S, C)
        inv_s = pl.reciprocal(jnp.sum(e, axis=-1, keepdims=True), approx=True)

        col = jax.lax.broadcasted_iota(jnp.int32, (sub_rows, C), 1)
        onehot = col == t_col                                      # (S, C) mask

        if gamma == 0:
            # p is never materialized: intersection = scale * e[r, t[r]] / sum(e),
            # cardinality = scale * sum(softmax) + 1 = scale + 1 (constant).
            inter = scale * jnp.sum(jnp.where(onehot, e, 0.0),
                                    axis=-1, keepdims=True) * inv_s
            inv_den = 1.0 / (scale + 1.0 + eps + smooth)
            dice = (2.0 * inter + smooth) * inv_den
        else:
            p = e * inv_s
            w = (1.0 - p) ** gamma * p          # integer gamma -> integer_pow (VPU)
            if scale != 1.0:
                w = scale * w
            inter = jnp.sum(jnp.where(onehot, w, 0.0), axis=-1, keepdims=True)
            card = jnp.sum(w, axis=-1, keepdims=True) + 1.0
            dice = (2.0 * inter + smooth) * pl.reciprocal(
                card + eps + smooth, approx=True)

        # Validity: non-ignored target AND in-bounds row (last x block is
        # partial; its tail rows hold unspecified data -> must stay selected
        # out via where, never multiplied).
        rows = row_base + r0 + jax.lax.broadcasted_iota(
            jnp.int32, (sub_rows, 1), 0)
        valid = (t_col != ignore_index) & (rows < n_rows)           # (S, 1)
        loss = jnp.where(valid, 1.0 - dice, 0.0)

        loss_sum = jnp.sum(loss)
        valid_cnt = jnp.sum(valid.astype(jnp.float32))

        # Lane-dense (1, 8, 128) partial: sublane 0 = loss sum, sublane 1 = count.
        sub_idx = jax.lax.broadcasted_iota(jnp.int32, (1, 8, 128), 1)
        out_ref[...] += jnp.where(sub_idx == 0, loss_sum,
                                  jnp.where(sub_idx == 1, valid_cnt, 0.0))


def dice_loss(x, target, *, gamma=0, scale=1.0, reduction="mean",
              ignore_index=-100, eps=1e-6, smooth=0.0,
              sub_rows=None, max_block_rows=None):
    """Pallas DiceLoss forward.  x:(N,C) f32/bf16, target:(N,) int."""
    N, C = x.shape
    if x.dtype not in (jnp.float32, jnp.bfloat16):
        x = x.astype(jnp.float32)
    t = target.astype(jnp.int32)

    # --- chip-aware VMEM budgets (v7x has 64 MiB per-TC, v5e/v6e have 128) ---
    vmem_cap = _chip_vmem_bytes()
    if vmem_cap >= 96 * 1024 * 1024:          # v5e / v6e
        x_buf_budget = 16 * 1024 * 1024       # per x buffer (double-buffered)
        vmem_limit = 64 * 1024 * 1024
    else:                                      # v7x (or unknown -> conservative)
        x_buf_budget = 8 * 1024 * 1024
        vmem_limit = 40 * 1024 * 1024

    # --- tiling: big grid blocks, small in-kernel sub-chunks ---
    sub = sub_rows if sub_rows is not None else _pick_sub_rows(C, N)
    sub = max(16, (sub // 16) * 16)
    itemsize = jnp.dtype(x.dtype).itemsize
    rows_cap = max(sub, ((x_buf_budget // (C * itemsize)) // sub) * sub)
    block_n = min(rows_cap, _round_up(_cdiv(N, 2), sub))   # >=2 blocks for v7x's 2 TCs
    if max_block_rows is not None:
        block_n = min(block_n, max(sub, (_round_up(max_block_rows, sub))))
    block_n = max(block_n, sub)
    nsub = block_n // sub
    num_blocks = _cdiv(N, block_n)
    n_pad = num_blocks * block_n

    # Only the tiny target vector is padded (x is streamed unpadded).
    if n_pad != N:
        t = jnp.pad(t, (0, n_pad - N), constant_values=ignore_index)
    t3d = t.reshape(num_blocks, nsub, sub)     # lane-dense, contiguous DMA

    kernel = functools.partial(
        _dice_loss_kernel, sub_rows=sub, n_rows=N, block_n=block_n,
        gamma=gamma, scale=float(scale), ignore_index=int(ignore_index),
        eps=float(eps), smooth=float(smooth))

    partials = pl.pallas_call(
        kernel,
        out_shape=jax.ShapeDtypeStruct((num_blocks, 8, 128), jnp.float32),
        grid_spec=pltpu.PrefetchScalarGridSpec(
            num_scalar_prefetch=0,
            grid=(num_blocks,),
            in_specs=[
                pl.BlockSpec((block_n, C), lambda i: (i, 0)),
                pl.BlockSpec((1, nsub, sub), lambda i: (i, 0, 0)),
            ],
            out_specs=pl.BlockSpec((1, 8, 128), lambda i: (i, 0, 0)),
        ),
        compiler_params=pltpu.CompilerParams(
            dimension_semantics=("parallel",),   # row blocks independent (2 TCs on v7x)
            vmem_limit_bytes=vmem_limit,
        ),
    )(x, t3d)

    total = jnp.sum(partials[:, 0, 0])
    count = jnp.sum(partials[:, 1, 0])
    if reduction == "sum":
        return total
    if reduction is None or reduction == "none":
        # TODO(synk): reduction='none' (per-row losses of the masked subset) not implemented.
        raise NotImplementedError("reduction='none' is not supported by this kernel")
    # reduction='mean' over rows whose target != ignore_index (NaN if none).
    return total / count


def _dice_loss_ref(x, target, *, gamma=0, scale=1.0, ignore_index=-100,
                   eps=1e-6, smooth=0.0):
    """Pure-JAX reference mirroring the PyTorch module (reduction='mean')."""
    x = x.astype(jnp.float32)
    p = jax.nn.softmax(x, axis=1)
    p = scale * (1.0 - p) ** gamma * p
    valid = target != ignore_index
    one_hot = jax.nn.one_hot(jnp.maximum(target, 0), x.shape[-1], dtype=x.dtype)
    intersection = jnp.sum(p * one_hot, axis=-1)
    cardinality = jnp.sum(p + one_hot, axis=-1)
    dice = (2.0 * intersection + smooth) / (cardinality + eps + smooth)
    loss = jnp.where(valid, 1.0 - dice, 0.0)
    return jnp.sum(loss) / jnp.sum(valid.astype(x.dtype))


if __name__ == "__main__":
    key = jax.random.PRNGKey(0)
    k1, k2, k3, k4, k5, k6, k7, k8 = jax.random.split(key, 8)

    # --- case 1: defaults (gamma=0, scale=1), f32, with ignore_index rows ---
    N, C = 16, 32
    x = jax.random.normal(k1, (N, C), dtype=jnp.float32)
    target = jax.random.randint(k2, (N,), 0, C, dtype=jnp.int32)
    target = target.at[3].set(-100)
    target = target.at[11].set(-100)
    out = dice_loss(x, target)
    jax.block_until_ready(out)
    ref = _dice_loss_ref(x, target)
    assert jnp.allclose(out, ref, rtol=1e-3, atol=1e-3), (out, ref)

    # --- case 2: nonzero gamma/scale, N not a multiple of 16 (t padding path) ---
    N2, C2 = 13, 20
    x2 = jax.random.normal(k3, (N2, C2), dtype=jnp.float32)
    target2 = jax.random.randint(k4, (N2,), 0, C2, dtype=jnp.int32)
    target2 = target2.at[5].set(-100)
    out2 = dice_loss(x2, target2, gamma=2, scale=0.5, smooth=1.0)
    jax.block_until_ready(out2)
    ref2 = _dice_loss_ref(x2, target2, gamma=2, scale=0.5, smooth=1.0)
    assert jnp.allclose(out2, ref2, rtol=1e-3, atol=1e-3), (out2, ref2)

    # --- case 3: multi-block grid + multi-sub-chunk loop + partial last x block ---
    N3, C3 = 200, 16
    x3 = jax.random.normal(k5, (N3, C3), dtype=jnp.float32)
    target3 = jax.random.randint(k6, (N3,), 0, C3, dtype=jnp.int32)
    target3 = target3.at[0].set(-100)
    target3 = target3.at[150].set(-100)
    out3 = dice_loss(x3, target3, sub_rows=64, max_block_rows=128)
    jax.block_until_ready(out3)
    ref3 = _dice_loss_ref(x3, target3)
    assert jnp.allclose(out3, ref3, rtol=1e-3, atol=1e-3), (out3, ref3)

    # --- case 4: bf16 logits streamed directly (in-kernel upcast) ---
    N4, C4 = 64, 32
    x4 = jax.random.normal(k7, (N4, C4), dtype=jnp.float32).astype(jnp.bfloat16)
    target4 = jax.random.randint(k8, (N4,), 0, C4, dtype=jnp.int32)
    target4 = target4.at[7].set(-100)
    out4 = dice_loss(x4, target4)
    jax.block_until_ready(out4)
    ref4 = _dice_loss_ref(x4.astype(jnp.float32), target4)
    assert jnp.allclose(out4, ref4, rtol=2e-3, atol=2e-3), (out4, ref4)

    print("KERNEL_OK")
</pallas_src>

<mosaic_0001>
module attributes {stable_mosaic.version = 11 : i64} {
  func.func @_dice_loss_kernel(%arg0: i32, %arg1: memref<16x32xf32, #tpu.memory_space<vmem>>, %arg2: memref<1x1x16xi32, #tpu.memory_space<vmem>>, %arg3: memref<1x8x128xf32, #tpu.memory_space<vmem>>) attributes {dimension_semantics = [#tpu.dimension_semantics<parallel>], iteration_bounds = array<i64: 1>, scalar_prefetch = 0 : i64, scratch_operands = 0 : i64, tpu.core_type = #tpu.core_type<tc>, window_params = [{transform_indices = @transform_0, window_bounds = array<i64: 16, 32>}, {transform_indices = @transform_1, window_bounds = array<i64: 1, 1, 16>}, {transform_indices = @transform_2, window_bounds = array<i64: 1, 8, 128>}]} {
    %c16_i32 = arith.constant 16 : i32
    %0 = arith.muli %arg0, %c16_i32 : i32
    %cst = arith.constant 0.000000e+00 : f32
    %1 = vector.broadcast %cst : f32 to vector<1x8x128xf32>
    %c0 = arith.constant 0 : index
    %c0_0 = arith.constant 0 : index
    %c0_1 = arith.constant 0 : index
    %2 = vector.load %arg3[%c0, %c0_0, %c0_1] : memref<1x8x128xf32, #tpu.memory_space<vmem>>, vector<1x8x128xf32>
    tpu.vector_store %arg3[%c0, %c0_0, %c0_1], %1 {strides = array<i32>} : memref<1x8x128xf32, #tpu.memory_space<vmem>>, vector<1x8x128xf32>,
    %c0_i32 = arith.constant 0 : i32
    %c1_i32 = arith.constant 1 : i32
    %3 = arith.muli %c0_i32, %c1_i32 : i32
    %c0_i32_2 = arith.constant 0 : i32
    %4 = arith.addi %c0_i32_2, %3 : i32
    %c16_i32_3 = arith.constant 16 : i32
    %5 = arith.muli %4, %c16_i32_3 : i32
    %6 = tpu.assume_multiple %5, 16 : i32
    %7 = arith.index_cast %6 : i32 to index
    %c0_4 = arith.constant 0 : index
    %8 = vector.load %arg1[%7, %c0_4] : memref<16x32xf32, #tpu.memory_space<vmem>>, vector<16x32xf32>
    %c0_5 = arith.constant 0 : index
    %9 = arith.index_cast %4 : i32 to index
    %c0_6 = arith.constant 0 : index
    %10 = vector.load %arg2[%c0_5, %9, %c0_6] : memref<1x1x16xi32, #tpu.memory_space<vmem>>, vector<1x1x16xi32>
    %11 = vector.shape_cast %10 : vector<1x1x16xi32> to vector<1x16xi32>
    %12 = tpu.transpose %11, [1, 0] : vector<1x16xi32> -> vector<16x1xi32>
    %cst_7 = arith.constant dense<0xFF800000> : vector<16xf32>
    %13 = vector.multi_reduction <maximumf>, %8, %cst_7 [1] : vector<16x32xf32> to vector<16xf32>
    %14 = vector.shape_cast %13 : vector<16xf32> to vector<16x1xf32>
    %15 = vector.broadcast %14 : vector<16x1xf32> to vector<16x32xf32>
    %16 = arith.subf %8, %15 : vector<16x32xf32>
    %17 = math.exp %16 : vector<16x32xf32>
    %cst_8 = arith.constant dense<0.000000e+00> : vector<16xf32>
    %18 = vector.multi_reduction <add>, %17, %cst_8 [1] : vector<16x32xf32> to vector<16xf32>
    %19 = vector.shape_cast %18 : vector<16xf32> to vector<16x1xf32>
    %20 = tpu.reciprocal %19 {approx = true} : vector<16x1xf32> -> vector<16x1xf32>
    %21 = tpu.iota {dimensions = array<i32: 1>} : vector<16x32xi32>
    %22 = vector.broadcast %12 : vector<16x1xi32> to vector<16x32xi32>
    %23 = arith.cmpi eq, %21, %22 : vector<16x32xi32>
    %cst_9 = arith.constant 0.000000e+00 : f32
    %24 = vector.broadcast %cst_9 : f32 to vector<16x32xf32>
    %25 = arith.select %23, %17, %24 : vector<16x32xi1>, vector<16x32xf32>
    %cst_10 = arith.constant dense<0.000000e+00> : vector<16xf32>
    %26 = vector.multi_reduction <add>, %25, %cst_10 [1] : vector<16x32xf32> to vector<16xf32>
    %27 = vector.shape_cast %26 : vector<16xf32> to vector<16x1xf32>
    %cst_11 = arith.constant 1.000000e+00 : f32
    %28 = vector.broadcast %cst_11 : f32 to vector<16x1xf32>
    %29 = arith.mulf %28, %27 : vector<16x1xf32>
    %30 = arith.mulf %29, %20 : vector<16x1xf32>
    %cst_12 = arith.constant 2.000000e+00 : f32
    %31 = vector.broadcast %cst_12 : f32 to vector<16x1xf32>
    %32 = arith.mulf %31, %30 : vector<16x1xf32>
    %cst_13 = arith.constant 0.000000e+00 : f32
    %33 = vector.broadcast %cst_13 : f32 to vector<16x1xf32>
    %34 = arith.addf %32, %33 : vector<16x1xf32>
    %cst_14 = arith.constant 0.499999762 : f32
    %35 = vector.broadcast %cst_14 : f32 to vector<16x1xf32>
    %36 = arith.mulf %34, %35 : vector<16x1xf32>
    %37 = arith.addi %0, %6 : i32
    %38 = tpu.iota {dimensions = array<i32: 0>} : vector<16x1xi32>
    %39 = vector.broadcast %37 : i32 to vector<16x1xi32>
    %40 = arith.addi %39, %38 : vector<16x1xi32>
    %c-100_i32 = arith.constant -100 : i32
    %41 = vector.broadcast %c-100_i32 : i32 to vector<16x1xi32>
    %42 = arith.cmpi ne, %12, %41 : vector<16x1xi32>
    %c16_i32_15 = arith.constant 16 : i32
    %43 = vector.broadcast %c16_i32_15 : i32 to vector<16x1xi32>
    %44 = arith.cmpi slt, %40, %43 : vector<16x1xi32>
    %45 = arith.andi %42, %44 : vector<16x1xi1>
    %cst_16 = arith.constant 1.000000e+00 : f32
    %46 = vector.broadcast %cst_16 : f32 to vector<16x1xf32>
    %47 = arith.subf %46, %36 : vector<16x1xf32>
    %cst_17 = arith.constant 0.000000e+00 : f32
    %48 = vector.broadcast %cst_17 : f32 to vector<16x1xf32>
    %49 = arith.select %45, %47, %48 : vector<16x1xi1>, vector<16x1xf32>
    %50 = vector.shape_cast %49 : vector<16x1xf32> to vector<1x16x1xf32>
    %cst_18 = arith.constant dense<0.000000e+00> : vector<1xf32>
    %51 = vector.multi_reduction <add>, %50, %cst_18 [1, 2] : vector<1x16x1xf32> to vector<1xf32>
    %52 = vector.shape_cast %51 : vector<1xf32> to vector<1x1x1xf32>
    %53 = vector.extract %52[0, 0, 0] : f32 from vector<1x1x1xf32>
    %54 = arith.extui %45 : vector<16x1xi1> to vector<16x1xi32>
    %55 = arith.sitofp %54 : vector<16x1xi32> to vector<16x1xf32>
    %56 = vector.shape_cast %55 : vector<16x1xf32> to vector<1x16x1xf32>
    %cst_19 = arith.constant dense<0.000000e+00> : vector<1xf32>
    %57 = vector.multi_reduction <add>, %56, %cst_19 [1, 2] : vector<1x16x1xf32> to vector<1xf32>
    %58 = vector.shape_cast %57 : vector<1xf32> to vector<1x1x1xf32>
    %59 = vector.extract %58[0, 0, 0] : f32 from vector<1x1x1xf32>
    %60 = tpu.iota {dimensions = array<i32: 1>} : vector<1x8x128xi32>
    %c0_20 = arith.constant 0 : index
    %c0_21 = arith.constant 0 : index
    %c0_22 = arith.constant 0 : index
    %61 = vector.load %arg3[%c0_20, %c0_21, %c0_22] : memref<1x8x128xf32, #tpu.memory_space<vmem>>, vector<1x8x128xf32>
    %c0_i32_23 = arith.constant 0 : i32
    %62 = vector.broadcast %c0_i32_23 : i32 to vector<1x8x128xi32>
    %63 = arith.cmpi eq, %60, %62 : vector<1x8x128xi32>
    %c1_i32_24 = arith.constant 1 : i32
    %64 = vector.broadcast %c1_i32_24 : i32 to vector<1x8x128xi32>
    %65 = arith.cmpi eq, %60, %64 : vector<1x8x128xi32>
    %cst_25 = arith.constant 0.000000e+00 : f32
    %66 = vector.broadcast %59 : f32 to vector<1x8x128xf32>
    %67 = vector.broadcast %cst_25 : f32 to vector<1x8x128xf32>
    %68 = arith.select %65, %66, %67 : vector<1x8x128xi1>, vector<1x8x128xf32>
    %69 = vector.broadcast %53 : f32 to vector<1x8x128xf32>
    %70 = arith.select %63, %69, %68 : vector<1x8x128xi1>, vector<1x8x128xf32>
    %71 = arith.addf %61, %70 : vector<1x8x128xf32>
    %c0_26 = arith.constant 0 : index
    %c0_27 = arith.constant 0 : index
    %c0_28 = arith.constant 0 : index
    %72 = vector.load %arg3[%c0_26, %c0_27, %c0_28] : memref<1x8x128xf32, #tpu.memory_space<vmem>>, vector<1x8x128xf32>
    tpu.vector_store %arg3[%c0_26, %c0_27, %c0_28], %71 {strides = array<i32>} : memref<1x8x128xf32, #tpu.memory_space<vmem>>, vector<1x8x128xf32>,
    %c1_i32_29 = arith.constant 1 : i32
    return
  }
  func.func @transform_0(%arg0: i32) -> (i32, i32) {
    %c0_i32 = arith.constant 0 : i32
    %c0_i32_0 = arith.constant 0 : i32
    return %arg0, %c0_i32 : i32, i32
  }
  func.func @transform_1(%arg0: i32) -> (i32, i32, i32) {
    %c0_i32 = arith.constant 0 : i32
    %c0_i32_0 = arith.constant 0 : i32
    %c0_i32_1 = arith.constant 0 : i32
    return %arg0, %c0_i32, %c0_i32_0 : i32, i32, i32
  }
  func.func @transform_2(%arg0: i32) -> (i32, i32, i32) {
    %c0_i32 = arith.constant 0 : i32
    %c0_i32_0 = arith.constant 0 : i32
    %c0_i32_1 = arith.constant 0 : i32
    return %arg0, %c0_i32, %c0_i32_0 : i32, i32, i32
  }
}

</mosaic_0001>

<llo_original>
// kernel: tpu_custom_call.1
$region0: #{tpu_custom_call.1}
  #allocation0 [shape = 'u32[]', space=smem, size = 0x4, offset = 0x4, fixed_abs, tag = 'smem constant byte address 0x4 - core index']
  #allocation1 [shape = 'u32[72,128]{1,0:T(1,128)}', space=vmem, size = 0x9000, scoped, tag = 'internal scratch']
  %s0 = inlined_call_operand.hbm [shape: f32[16,32], index: 0, kind: input, shape index: {}]
  %s1 = inlined_call_operand.hbm [shape: s32[1,1,16], index: 1, kind: input, shape index: {}]
  %s2 = inlined_call_operand.hbm [shape: f32[1,8,128], index: 2, kind: output, shape index: {}]
  %s3 = sld [smem:[#allocation0]]
  $region26: #{tpu_custom_call.1} parent=0
    _
  %s5 = ssub.s32 1, %s3
  %s6 = scalar_select 0, %s5, %s3
  $region1: #{tpu_custom_call.1} parent=0
    #allocation2 [shape = 'u8[8192]{0}', space=vmem, size = 0x2000, scoped, tag = 'input window, operand 0, single buffered']
    #allocation3 [shape = 's32[1]{0}', space=sflag, size = 0x4, scoped, tag = 'scoped memory for tpu_custom_call.1']
    #allocation4 [shape = 's32[1]{0}', space=sflag, size = 0x4, scoped, tag = 'scoped memory for tpu_custom_call.1']
    #allocation5 [shape = 'u8[512]{0}', space=vmem, size = 0x400, scoped, tag = 'input window, operand 1, single buffered']
    #allocation6 [shape = 's32[1]{0}', space=sflag, size = 0x4, scoped, tag = 'scoped memory for tpu_custom_call.1']
    #allocation7 [shape = 'u8[4096]{0}', space=vmem, size = 0x1000, scoped, tag = 'output window, operand 0, single buffered']
    %7 = vsyncpa [#allocation3], 0
    %8 = vsyncpa [#allocation6], 0
    %9 = vsyncpa [#allocation4], 0
    // Predicated region
    $region2: #{tpu_custom_call.1} parent=1 // pred_check
      _
    $region3: #{tpu_custom_call.1} parent=1 // pred_check_branch
      %11 = sbr.rel (0) target = $region5
    $region4: #{tpu_custom_call.1} parent=1 // pred_region
      %13 = vsyncadd [#allocation3], 0
      %s14 = sshll.u32 %s0, 4
      %s15 = int_to_ptr.hbm [resolvable:$true] %s14
      %s16 = sshll.u32 [#allocation2], 4
      %s17 = int_to_ptr.vmem [resolvable:$true] %s16
      %22 = dma.hbm_to_vmem [thread:$0]  %s15, 256, %s17, [#allocation3], 128, 128, 8
    $region5: #{tpu_custom_call.1} parent=1 // pred_fallthru
      _
    // Predicated region
    $region6: #{tpu_custom_call.1} parent=1 // pred_check
      _
    $region7: #{tpu_custom_call.1} parent=1 // pred_check_branch
      %24 = sbr.rel (0) target = $region9
    $region8: #{tpu_custom_call.1} parent=1 // pred_region
      %26 = vsyncadd [#allocation6], 0
      %s28 = sshll.u32 %s1, 4
      %s29 = int_to_ptr.hbm [resolvable:$true] %s28
      %s30 = sshll.u32 [#allocation5], 4
      %s31 = int_to_ptr.vmem [resolvable:$true] %s30
      %33 = dma.hbm_to_vmem [thread:$0]  %s29, 16, %s31, [#allocation6]
    $region9: #{tpu_custom_call.1} parent=1 // pred_fallthru
      _
    // Predicated region
    $region10: #{tpu_custom_call.1} parent=1 // pred_check
      _
    $region11: #{tpu_custom_call.1} parent=1 // pred_check_branch
      %35 = sbr.rel (0) target = $region13
    $region12: #{tpu_custom_call.1} parent=1 // pred_region
      %37 = dma.done [#allocation3], 256
    $region13: #{tpu_custom_call.1} parent=1 // pred_fallthru
      _
    // Predicated region
    $region14: #{tpu_custom_call.1} parent=1 // pred_check
      _
    $region15: #{tpu_custom_call.1} parent=1 // pred_check_branch
      %39 = sbr.rel (0) target = $region17
    $region16: #{tpu_custom_call.1} parent=1 // pred_region
      %41 = dma.done [#allocation6], 16
    $region17: #{tpu_custom_call.1} parent=1 // pred_fallthru
      _
    %s42 = smul.u32 0, 16
    %43 = vst [vmem:[#allocation7] sm:$0xff] 0.0
    %v44 = vld [vmem:[#allocation2] sm:$0xff]
    %v45 = vld [vmem:[#allocation2 + $0x8] sm:$0xff]
    %v46 = vld [vmem:[#allocation5] sm:$0x1]
    %47 = vxpose.xlu0.b32.start [1/16] %v46, 128
    %48 = vxpose.xlu0.b32.cont [2/16] 0, 128
    %49 = vxpose.xlu0.b32.cont [3/16] 0, 128
    %50 = vxpose.xlu0.b32.cont [4/16] 0, 128
    %51 = vxpose.xlu0.b32.cont [5/16] 0, 128
    %52 = vxpose.xlu0.b32.cont [6/16] 0, 128
    %53 = vxpose.xlu0.b32.cont [7/16] 0, 128
    %54 = vxpose.xlu0.b32.cont [8/16] 0, 128
    %55 = vxpose.xlu0.b32.cont [9/16] 0, 128
    %56 = vxpose.xlu0.b32.cont [10/16] 0, 128
    %57 = vxpose.xlu0.b32.cont [11/16] 0, 128
    %58 = vxpose.xlu0.b32.cont [12/16] 0, 128
    %59 = vxpose.xlu0.b32.cont [13/16] 0, 128
    %60 = vxpose.xlu0.b32.cont [14/16] 0, 128
    %61 = vxpose.xlu0.b32.cont [15/16] 0, 128
    %62 = vxpose.xlu0.b32.end [16/16] 0, 128
    %v63 = vpop.trf.xlu0
    %v64 = vpop.trf.xlu0
    %v65 = vpop.trf.xlu0
    %v66 = vpop.trf.xlu0
    %v67 = vpop.trf.xlu0
    %v68 = vpop.trf.xlu0
    %v69 = vpop.trf.xlu0
    %v70 = vpop.trf.xlu0
    %v71 = vpop.trf.xlu0
    %v72 = vpop.trf.xlu0
    %v73 = vpop.trf.xlu0
    %v74 = vpop.trf.xlu0
    %v75 = vpop.trf.xlu0
    %v76 = vpop.trf.xlu0
    %v77 = vpop.trf.xlu0
    %v78 = vpop.trf.xlu0
    %vm79 = vcmask 261120
    %v80 = vsel %vm79, %v44, -inf
    %81 = vmax.xlane.f32.xlu0 %v80
    %v82 = vpop.xlane.xlu0 %81
    %v83 = vsel %vm79, %v45, -inf
    %84 = vmax.xlane.f32.xlu0 %v83
    %v85 = vpop.xlane.xlu0 %84
    %v86 = vsub.f32 %v44, %v82
    %v87 = vsub.f32 %v45, %v85
    %v88 = vmul.f32 %v86, 1.442695
    %v89 = vpow.pop %v88
    %v90 = vmul.f32 %v87, 1.442695
    %v91 = vpow.pop %v90
    %v92 = vsel %vm79, %v89, 0.0
    %93 = vadd.xlane.f32.xlu0 %v92
    %v94 = vpop.xlane.xlu0 %93
    %v95 = vsel %vm79, %v91, 0.0
    %96 = vadd.xlane.f32.xlu0 %v95
    %v97 = vpop.xlane.xlu0 %96
    %v98 = vrcp.pop %v94
    %v99 = vrcp.pop %v97
    %v100 = vlaneseq
    %v101 = vand.u32 %v100, 127
    %102 = vset.pattern.permute.xlu0 0
    %103 = vperm.xlu0 %102, %v63
    %v104 = vpop.permute.xlu0 %103
    %105 = vset.pattern.permute.xlu0 0
    %106 = vperm.xlu0 %105, %v64
    %v107 = vpop.permute.xlu0 %106
    %vm108 = vcmp.eq.s32.totalorder %v101, %v104
    %vm109 = vcmp.eq.s32.totalorder %v101, %v107
    %v110 = vsel %vm108, %v89, 0.0
    %v111 = vsel %vm109, %v91, 0.0
    %v112 = vsel %vm79, %v110, 0.0
    %113 = vadd.xlane.f32.xlu0 %v112
    %v114 = vpop.xlane.xlu0 %113
    %v115 = vsel %vm79, %v111, 0.0
    %116 = vadd.xlane.f32.xlu0 %v115
    %v117 = vpop.xlane.xlu0 %116
    %v118 = vmul.f32 %v114, %v98
    %v119 = vmul.f32 %v117, %v99
    %v120 = vmul.f32 %v118, 2.0
    %v121 = vmul.f32 %v119, 2.0
    %v122 = vadd.f32 %v120, 0.0
    %v123 = vadd.f32 %v121, 0.0
    %v124 = vmul.f32 %v122, 0.49999976
    %v125 = vmul.f32 %v123, 0.49999976
    %s126 = sadd.s32 %s42, 0
    %v127 = vlaneseq
    %v128 = vshrl.u32 %v127, 7
    %v129 = vadd.s32 %v128, 8
    %v130 = vstv %s126
    %v131 = vadd.s32 %v130, %v128
    %v132 = vadd.s32 %v130, %v129
    %vm133 = vcmp.ne.s32.totalorder %v63, 4294967196
    %vm134 = vcmp.ne.s32.totalorder %v64, 4294967196
    %vm135 = vcmp.lt.s32.totalorder %v131, 16
    %vm136 = vcmp.lt.s32.totalorder %v132, 16
    %vm137 = vmand %vm133, %vm135
    %vm138 = vmand %vm134, %vm136
    %v139 = vsub.f32 1.0, %v124
    %v140 = vsub.f32 1.0, %v125
    %v141 = vsel %vm137, %v139, 0.0
    %v142 = vsel %vm138, %v140, 0.0
    %vm143 = vcmask 7168
    %v144 = vsel %vm143, %v141, 0.0
    %v145 = vsel %vm143, %v142, 0.0
    %v146 = vadd.f32 %v144, %v145
    %147 = vadd.xlane.f32.xlu0 %v146
    %v148 = vpop.xlane.xlu0 %147
    %v149 = vrot.slane %v148, 4
    %v150 = vadd.f32 %v148, %v149
    %v151 = vrot.slane %v150, 2
    %v152 = vadd.f32 %v150, %v151
    %v153 = vrot.slane %v152, 1
    %v154 = vadd.f32 %v152, %v153
    %s155 = vtos %v154
    %v156 = vsel %vm137, 1, 0
    %v157 = vsel %vm138, 1, 0
    %v158 = vcvt.s32.f32 %v156
    %v159 = vcvt.s32.f32 %v157
    %v160 = vsel %vm143, %v158, 0.0
    %v161 = vsel %vm143, %v159, 0.0
    %v162 = vadd.f32 %v160, %v161
    %163 = vadd.xlane.f32.xlu0 %v162
    %v164 = vpop.xlane.xlu0 %163
    %v165 = vrot.slane %v164, 4
    %v166 = vadd.f32 %v164, %v165
    %v167 = vrot.slane %v166, 2
    %v168 = vadd.f32 %v166, %v167
    %v169 = vrot.slane %v168, 1
    %v170 = vadd.f32 %v168, %v169
    %s171 = vtos %v170
    %v172 = vld [vmem:[#allocation7] sm:$0xff]
    %vm173 = vcmp.eq.s32.totalorder %v128, 0
    %vm174 = vcmp.eq.s32.totalorder %v128, 1
    %v175 = vstv %s171
    %v176 = vsel %vm174, %v175, 0.0
    %v177 = vstv %s155
    %v178 = vsel %vm173, %v177, %v176
    %v179 = vadd.f32 %v172, %v178
    %180 = vst [vmem:[#allocation7] sm:$0xff] %v179
    // Predicated region
    $region18: #{tpu_custom_call.1} parent=1 // pred_check
      _
    $region19: #{tpu_custom_call.1} parent=1 // pred_check_branch
      %182 = sbr.rel (0) target = $region21
    $region20: #{tpu_custom_call.1} parent=1 // pred_region
      %184 = vsyncadd [#allocation4], 0
      %s186 = sshll.u32 [#allocation7], 4
      %s187 = int_to_ptr.vmem [resolvable:$true] %s186
      %s188 = sshll.u32 %s2, 4
      %s189 = int_to_ptr.hbm [resolvable:$true] %s188
      %191 = dma.vmem_to_hbm [thread:$0]  %s187, 128, %s189, [#allocation4]
    $region21: #{tpu_custom_call.1} parent=1 // pred_fallthru
      _
    // Predicated region
    $region22: #{tpu_custom_call.1} parent=1 // pred_check
      _
    $region23: #{tpu_custom_call.1} parent=1 // pred_check_branch
      %193 = sbr.rel (0) target = $region25
    $region24: #{tpu_custom_call.1} parent=1 // pred_region
      %195 = dma.done [#allocation4], 128
    $region25: #{tpu_custom_call.1} parent=1 // pred_fallthru
      _
    %196 = vsyncpa [#allocation3], 1
    %197 = vsyncpa [#allocation6], 1
    %198 = vsyncpa [#allocation4], 1

</llo_original>
